<compile_context>
chip_gen: v7x
topology: tpu7x:2x2x1
jax: 0.10.0
libtpu: 0.0.40
codegen_flags: <defaults>
</compile_context>

<pallas_src>
import functools

import jax
import jax.numpy as jnp
from jax.experimental import pallas as pl
from jax.experimental.pallas import tpu as pltpu

ALPHA = 0.25
GAMMA = 2
LANE = 128
TILE_R_MAX = 8192  # 8192 x 128 f32 = 4 MiB per f32 input stream per block


def _focal_loss_kernel(x_ref, t_ref, o_ref, acc_ref, *, alpha, gamma, tile_r,
                       n_inner, n_blocks, rows_valid_last, needs_mask,
                       has_phantom, assume_binary):
    s = pl.program_id(1)

    @pl.when(s == 0)
    def _():
        acc_ref[...] = jnp.zeros_like(acc_ref)

    x = x_ref[...].astype(jnp.float32)
    t = t_ref[...].astype(jnp.float32)

    # BCEWithLogitsLoss(reduction='none'), numerically stable form:
    #   loss = max(x, 0) - x*t + log1p(exp(-|x|))
    z = jnp.exp(-jnp.abs(x))  # single EUP exp per element
    loss_bce = jnp.maximum(x, 0.0) - x * t + jnp.log1p(z)

    if assume_binary:
        # For t in {0,1}:  1 - p_t = where(mismatch, 1, z) / (1 + z); no second
        # exp and no separate p_t / (1 - p_t) chain.  approx=True keeps the
        # reciprocal on the EUP slot (which has slack here).
        mismatch = (x > 0.0) != (t > 0.5)
        one_m = jnp.where(mismatch, 1.0, z) * pl.reciprocal(1.0 + z, approx=True)
    else:
        # Exact path for soft / non-binary targets (second EUP exp).
        one_m = 1.0 - jnp.exp(-loss_bce)

    # gamma stays a Python int -> integer power lowers to VPU multiplies.
    fl = (one_m ** gamma) * loss_bce

    if alpha >= 0:
        # alpha*t + (1-alpha)*(1-t) folded to a single mul + add.
        fl = ((1.0 - alpha) + (2.0 * alpha - 1.0) * t) * fl

    def accumulate(v):
        if tile_r % 8 == 0:
            # Pure VPU adds into the (8,128) vector accumulator (no XLU).
            acc_ref[...] += v.reshape(tile_r // 8, 8, LANE).sum(axis=0)
        else:
            # Tiny-input fallback (rows < 8): cross-sublane reduce once.
            acc_ref[0:1, :] += jnp.sum(v, axis=0, keepdims=True)

    if needs_mask or has_phantom:
        blk = pl.program_id(0) * n_inner + s
        last_blk = n_blocks - 1

        @pl.when(blk < last_blk)
        def _():
            accumulate(fl)  # steady-state blocks: no masking cost

        @pl.when(blk == last_blk)
        def _():
            if needs_mask:
                # Row-level validity against a trace-time constant (select,
                # not arithmetic masking, so stale-VMEM NaNs cannot leak).
                row = jax.lax.broadcasted_iota(jnp.int32, fl.shape, 0)
                accumulate(jnp.where(row < rows_valid_last, fl, 0.0))
            else:
                accumulate(fl)
        # blk > last_blk: phantom megacore step (clamped DMA) -> no accumulate.
    else:
        accumulate(fl)

    @pl.when(s == pl.num_programs(1) - 1)
    def _():
        o_ref[...] = acc_ref[...]


def _focal_elementwise(x, t, alpha, gamma):
    """Per-element focal loss (exact formula) — used for the XLA tail + ref."""
    loss_bce = jnp.maximum(x, 0.0) - x * t + jnp.log1p(jnp.exp(-jnp.abs(x)))
    p_t = jnp.exp(-loss_bce)
    fl = (1.0 - p_t) ** gamma * loss_bce
    if alpha >= 0:
        fl = (alpha * t + (1.0 - alpha) * (1.0 - t)) * fl
    return fl


def focal_loss(logits, targets, alpha=ALPHA, gamma=GAMMA, reduction='mean',
               assume_binary_targets=True, tile_rows=None):
    """Focal loss matching the PyTorch module (weight=None).

    Supports reduction in {'mean', 'sum'}.  `assume_binary_targets=True`
    enables a faster path that is exact only for hard {0,1} targets; pass
    False for soft targets (label smoothing / mixup).  bf16 logits/targets are
    accepted and kept narrow over HBM (the kernel upcasts internally).
    """
    if reduction not in ('mean', 'sum'):
        # TODO(synk): reduction='none' (full-size output map) not implemented.
        raise ValueError("Only 'mean' and 'sum' reductions are implemented.")
    # TODO(synk): per-element `weight` tensor (module's weight kwarg) not implemented.
    assert logits.shape == targets.shape

    n_valid = int(logits.size)
    if n_valid == 0:
        return jnp.zeros((), jnp.float32)

    x = jnp.ravel(logits)   # free reshape for contiguous arrays
    t = jnp.ravel(targets)  # keep caller dtype (bf16 / int8 stay narrow)

    rows = n_valid // LANE
    tail = n_valid - rows * LANE

    total = jnp.zeros((), jnp.float32)
    if tail:
        # <128-element tail handled in plain XLA: avoids a full-tensor pad copy.
        total = total + jnp.sum(_focal_elementwise(
            x[rows * LANE:].astype(jnp.float32),
            t[rows * LANE:].astype(jnp.float32), float(alpha), gamma))

    if rows:
        if tail:
            x2 = x[:rows * LANE].reshape(rows, LANE)
            t2 = t[:rows * LANE].reshape(rows, LANE)
        else:
            x2 = x.reshape(rows, LANE)
            t2 = t.reshape(rows, LANE)

        tr_max = TILE_R_MAX if tile_rows is None else int(tile_rows)
        if rows >= 8:
            tile_r = min(tr_max, (rows // 8) * 8)  # always a multiple of 8
        else:
            tile_r = rows
        n_blocks = pl.cdiv(rows, tile_r)
        # Always use both TensorCores when there is more than one block
        # (v7x megacore); serial & harmless on single-TC v5e/v6e.
        n_outer = 2 if n_blocks >= 2 else 1
        n_inner = pl.cdiv(n_blocks, n_outer)
        has_phantom = (n_outer * n_inner) != n_blocks
        needs_mask = (rows % tile_r) != 0
        rows_valid_last = rows - (n_blocks - 1) * tile_r

        if has_phantom:
            # Clamp the phantom step's DMA to the last real block.
            in_map = lambda c, s: (jnp.minimum(c * n_inner + s, n_blocks - 1), 0)
        else:
            in_map = lambda c, s: (c * n_inner + s, 0)

        kern = functools.partial(
            _focal_loss_kernel, alpha=float(alpha), gamma=gamma, tile_r=tile_r,
            n_inner=n_inner, n_blocks=n_blocks, rows_valid_last=rows_valid_last,
            needs_mask=needs_mask, has_phantom=has_phantom,
            assume_binary=assume_binary_targets)

        # Explicit scoped-VMEM budget: double-buffered input blocks + margin.
        bytes_per_step = tile_r * LANE * (x2.dtype.itemsize + t2.dtype.itemsize)
        vmem_limit = int(min(48 * 1024 * 1024,
                             max(16 * 1024 * 1024,
                                 2 * bytes_per_step + 8 * 1024 * 1024)))

        out = pl.pallas_call(
            kern,
            out_shape=jax.ShapeDtypeStruct((n_outer * 8, LANE), jnp.float32),
            grid_spec=pltpu.PrefetchScalarGridSpec(
                num_scalar_prefetch=0,
                grid=(n_outer, n_inner),
                in_specs=[
                    pl.BlockSpec((tile_r, LANE), in_map),
                    pl.BlockSpec((tile_r, LANE), in_map),
                ],
                out_specs=pl.BlockSpec((8, LANE), lambda c, s: (c, 0)),
                scratch_shapes=[pltpu.VMEM((8, LANE), jnp.float32)],
            ),
            compiler_params=pltpu.CompilerParams(
                dimension_semantics=("parallel", "arbitrary"),
                vmem_limit_bytes=vmem_limit),
        )(x2, t2)
        # Tiny final reduction of the per-core (8,128) partial sums in XLA.
        total = total + jnp.sum(out)

    if reduction == 'mean':
        total = total / jnp.float32(n_valid)
    return total


def _focal_loss_ref(logits, targets, alpha=ALPHA, gamma=GAMMA, reduction='mean'):
    fl = _focal_elementwise(logits.astype(jnp.float32),
                            targets.astype(jnp.float32), float(alpha), gamma)
    return jnp.mean(fl) if reduction == 'mean' else jnp.sum(fl)


if __name__ == "__main__":
    key = jax.random.PRNGKey(0)
    k1, k2, k3, k4, k5, k6 = jax.random.split(key, 6)

    # 1) Small segmentation-style NCHW logits map (2048 elems, 128-divisible).
    shape1 = (2, 4, 16, 16)
    logits1 = jax.random.normal(k1, shape1, dtype=jnp.float32)
    targets1 = jax.random.bernoulli(k2, p=0.3, shape=shape1).astype(jnp.bfloat16)
    out1 = jax.block_until_ready(focal_loss(logits1, targets1))
    ref1 = jax.block_until_ready(_focal_loss_ref(logits1, targets1))
    assert jnp.allclose(out1, ref1, rtol=1e-2, atol=1e-6), (out1, ref1)

    # Exact (non-approx) soft-target path must match tightly.
    out1b = jax.block_until_ready(
        focal_loss(logits1, targets1, assume_binary_targets=False))
    assert jnp.allclose(out1b, ref1, rtol=1e-4, atol=1e-6), (out1b, ref1)

    # 2) Ragged size: two blocks across two "cores", masked last block,
    #    <128-element tail handled in XLA, reduction='sum'.
    shape2 = (2, 3, 37, 41)  # 9102 elems -> rows=71, tail=14
    logits2 = jax.random.normal(k3, shape2, dtype=jnp.float32)
    targets2 = jax.random.bernoulli(k4, p=0.5, shape=shape2).astype(jnp.float32)
    out2 = jax.block_until_ready(focal_loss(logits2, targets2, reduction='sum'))
    ref2 = jax.block_until_ready(_focal_loss_ref(logits2, targets2, reduction='sum'))
    assert jnp.allclose(out2, ref2, rtol=1e-2, atol=1e-5), (out2, ref2)

    # 3) Forced small tile -> odd block count: exercises the phantom (clamped)
    #    megacore step + masked last block + XLA tail together.
    shape3 = (2215,)  # rows=17, tail=39; tile_rows=8 -> n_blocks=3 (odd)
    logits3 = jax.random.normal(k5, shape3, dtype=jnp.float32)
    targets3 = jax.random.bernoulli(k6, p=0.3, shape=shape3).astype(jnp.bfloat16)
    out3 = jax.block_until_ready(focal_loss(logits3, targets3, tile_rows=8))
    ref3 = jax.block_until_ready(_focal_loss_ref(logits3, targets3))
    assert jnp.allclose(out3, ref3, rtol=1e-2, atol=1e-6), (out3, ref3)

    print("KERNEL_OK")
</pallas_src>

<mosaic_0001>
module attributes {stable_mosaic.version = 11 : i64} {
  func.func @_focal_loss_kernel(%arg0: i32, %arg1: i32, %arg2: memref<16x128xf32, #tpu.memory_space<vmem>>, %arg3: memref<16x128xbf16, #tpu.memory_space<vmem>>, %arg4: memref<8x128xf32, #tpu.memory_space<vmem>>, %arg5: memref<8x128xf32, #tpu.memory_space<vmem>>) attributes {dimension_semantics = [#tpu.dimension_semantics<parallel>, #tpu.dimension_semantics<arbitrary>], iteration_bounds = array<i64: 1, 1>, scalar_prefetch = 0 : i64, scratch_operands = 1 : i64, tpu.core_type = #tpu.core_type<tc>, window_params = [{transform_indices = @transform_0, window_bounds = array<i64: 16, 128>}, {transform_indices = @transform_1, window_bounds = array<i64: 16, 128>}, {transform_indices = @transform_2, window_bounds = array<i64: 8, 128>}]} {
    %c0_i32 = arith.constant 0 : i32
    %0 = arith.cmpi eq, %arg1, %c0_i32 : i32
    %1 = arith.extui %0 : i1 to i32
    %c0_i32_0 = arith.constant 0 : i32
    %2 = arith.cmpi ne, %1, %c0_i32_0 : i32
    scf.if %2 {
      %cst_18 = arith.constant 0.000000e+00 : f32
      %42 = vector.broadcast %cst_18 : f32 to vector<8x128xf32>
      %c0_19 = arith.constant 0 : index
      %c0_20 = arith.constant 0 : index
      %43 = vector.load %arg5[%c0_19, %c0_20] : memref<8x128xf32, #tpu.memory_space<vmem>>, vector<8x128xf32>
      tpu.vector_store %arg5[%c0_19, %c0_20], %42 {strides = array<i32>} : memref<8x128xf32, #tpu.memory_space<vmem>>, vector<8x128xf32>,
    } else {
    }
    %c0 = arith.constant 0 : index
    %c0_1 = arith.constant 0 : index
    %3 = vector.load %arg2[%c0, %c0_1] : memref<16x128xf32, #tpu.memory_space<vmem>>, vector<16x128xf32>
    %c0_2 = arith.constant 0 : index
    %c0_3 = arith.constant 0 : index
    %4 = vector.load %arg3[%c0_2, %c0_3] : memref<16x128xbf16, #tpu.memory_space<vmem>>, vector<16x128xbf16>
    %5 = arith.extf %4 : vector<16x128xbf16> to vector<16x128xf32>
    %6 = math.absf %3 : vector<16x128xf32>
    %cst = arith.constant 0.000000e+00 : f32
    %7 = vector.broadcast %cst : f32 to vector<16x128xf32>
    %8 = arith.subf %7, %6 : vector<16x128xf32>
    %9 = math.exp %8 : vector<16x128xf32>
    %cst_4 = arith.constant 0.000000e+00 : f32
    %10 = vector.broadcast %cst_4 : f32 to vector<16x128xf32>
    %11 = arith.maximumf %3, %10 : vector<16x128xf32>
    %12 = arith.mulf %3, %5 : vector<16x128xf32>
    %13 = arith.subf %11, %12 : vector<16x128xf32>
    %14 = math.log1p %9 : vector<16x128xf32>
    %15 = arith.addf %13, %14 : vector<16x128xf32>
    %cst_5 = arith.constant 0.000000e+00 : f32
    %16 = vector.broadcast %cst_5 : f32 to vector<16x128xf32>
    %17 = arith.cmpf ogt, %3, %16 : vector<16x128xf32>
    %cst_6 = arith.constant 5.000000e-01 : f32
    %18 = vector.broadcast %cst_6 : f32 to vector<16x128xf32>
    %19 = arith.cmpf ogt, %5, %18 : vector<16x128xf32>
    %20 = arith.xori %17, %19 : vector<16x128xi1>
    %cst_7 = arith.constant 1.000000e+00 : f32
    %21 = vector.broadcast %cst_7 : f32 to vector<16x128xf32>
    %22 = arith.select %20, %21, %9 : vector<16x128xi1>, vector<16x128xf32>
    %cst_8 = arith.constant 1.000000e+00 : f32
    %23 = vector.broadcast %cst_8 : f32 to vector<16x128xf32>
    %24 = arith.addf %23, %9 : vector<16x128xf32>
    %25 = tpu.reciprocal %24 {approx = true} : vector<16x128xf32> -> vector<16x128xf32>
    %26 = arith.mulf %22, %25 : vector<16x128xf32>
    %27 = arith.mulf %26, %26 : vector<16x128xf32>
    %28 = arith.mulf %27, %15 : vector<16x128xf32>
    %cst_9 = arith.constant -5.000000e-01 : f32
    %29 = vector.broadcast %cst_9 : f32 to vector<16x128xf32>
    %30 = arith.mulf %29, %5 : vector<16x128xf32>
    %cst_10 = arith.constant 7.500000e-01 : f32
    %31 = vector.broadcast %cst_10 : f32 to vector<16x128xf32>
    %32 = arith.addf %31, %30 : vector<16x128xf32>
    %33 = arith.mulf %32, %28 : vector<16x128xf32>
    %c0_11 = arith.constant 0 : index
    %c0_12 = arith.constant 0 : index
    %34 = vector.load %arg5[%c0_11, %c0_12] : memref<8x128xf32, #tpu.memory_space<vmem>>, vector<8x128xf32>
    %35 = vector.shape_cast %33 : vector<16x128xf32> to vector<2x8x128xf32>
    %cst_13 = arith.constant dense<0.000000e+00> : vector<8x128xf32>
    %36 = vector.multi_reduction <add>, %35, %cst_13 [0] : vector<2x8x128xf32> to vector<8x128xf32>
    %37 = arith.addf %34, %36 : vector<8x128xf32>
    %c0_14 = arith.constant 0 : index
    %c0_15 = arith.constant 0 : index
    %38 = vector.load %arg5[%c0_14, %c0_15] : memref<8x128xf32, #tpu.memory_space<vmem>>, vector<8x128xf32>
    tpu.vector_store %arg5[%c0_14, %c0_15], %37 {strides = array<i32>} : memref<8x128xf32, #tpu.memory_space<vmem>>, vector<8x128xf32>,
    %c0_i32_16 = arith.constant 0 : i32
    %39 = arith.cmpi eq, %arg1, %c0_i32_16 : i32
    %40 = arith.extui %39 : i1 to i32
    %c0_i32_17 = arith.constant 0 : i32
    %41 = arith.cmpi ne, %40, %c0_i32_17 : i32
    scf.if %41 {
      %c0_18 = arith.constant 0 : index
      %c0_19 = arith.constant 0 : index
      %42 = vector.load %arg5[%c0_18, %c0_19] : memref<8x128xf32, #tpu.memory_space<vmem>>, vector<8x128xf32>
      %c0_20 = arith.constant 0 : index
      %c0_21 = arith.constant 0 : index
      %43 = vector.load %arg4[%c0_20, %c0_21] : memref<8x128xf32, #tpu.memory_space<vmem>>, vector<8x128xf32>
      tpu.vector_store %arg4[%c0_20, %c0_21], %42 {strides = array<i32>} : memref<8x128xf32, #tpu.memory_space<vmem>>, vector<8x128xf32>,
    } else {
    }
    return
  }
  func.func @transform_0(%arg0: i32, %arg1: i32) -> (i32, i32) {
    %c1_i32 = arith.constant 1 : i32
    %0 = arith.muli %arg0, %c1_i32 : i32
    %1 = arith.addi %0, %arg1 : i32
    %c0_i32 = arith.constant 0 : i32
    %c0_i32_0 = arith.constant 0 : i32
    return %1, %c0_i32 : i32, i32
  }
  func.func @transform_1(%arg0: i32, %arg1: i32) -> (i32, i32) {
    %c1_i32 = arith.constant 1 : i32
    %0 = arith.muli %arg0, %c1_i32 : i32
    %1 = arith.addi %0, %arg1 : i32
    %c0_i32 = arith.constant 0 : i32
    %c0_i32_0 = arith.constant 0 : i32
    return %1, %c0_i32 : i32, i32
  }
  func.func @transform_2(%arg0: i32, %arg1: i32) -> (i32, i32) {
    %c0_i32 = arith.constant 0 : i32
    %c0_i32_0 = arith.constant 0 : i32
    return %arg0, %c0_i32 : i32, i32
  }
}

</mosaic_0001>

<llo_original>
// kernel: tpu_custom_call.1
$region0: #{tpu_custom_call.1}
  #allocation0 [shape = 'u32[]', space=smem, size = 0x4, offset = 0x4, fixed_abs, tag = 'smem constant byte address 0x4 - core index']
  #allocation1 [shape = 'u32[144,128]{1,0:T(1,128)}', space=vmem, size = 0x12000, scoped, tag = 'internal scratch']
  #allocation2 [shape = 'f32[8,128]{1,0:T(8,128)}', space=vmem, size = 0x1000, scoped, tag = 'scratch operand']
  %s0 = inlined_call_operand.hbm [shape: f32[16,128], index: 0, kind: input, shape index: {}]
  %s1 = inlined_call_operand.hbm [shape: bf16[16,128], index: 1, kind: input, shape index: {}]
  %s2 = inlined_call_operand.hbm [shape: f32[8,128], index: 2, kind: output, shape index: {}]
  %s3 = sld [smem:[#allocation0]]
  $region34: #{tpu_custom_call.1} parent=0
    _
  %s5 = ssub.s32 1, %s3
  %s6 = scalar_select 0, %s5, %s3
  $region1: #{tpu_custom_call.1} parent=0
    #allocation3 [shape = 'u8[8192]{0}', space=vmem, size = 0x2000, scoped, tag = 'input window, operand 0, single buffered']
    #allocation4 [shape = 's32[1]{0}', space=sflag, size = 0x4, scoped, tag = 'scoped memory for tpu_custom_call.1']
    #allocation5 [shape = 's32[1]{0}', space=sflag, size = 0x4, scoped, tag = 'scoped memory for tpu_custom_call.1']
    #allocation6 [shape = 'u8[4096]{0}', space=vmem, size = 0x1000, scoped, tag = 'input window, operand 1, single buffered']
    #allocation7 [shape = 's32[1]{0}', space=sflag, size = 0x4, scoped, tag = 'scoped memory for tpu_custom_call.1']
    #allocation8 [shape = 'u8[4096]{0}', space=vmem, size = 0x1000, scoped, tag = 'output window, operand 0, single buffered']
    %7 = vsyncpa [#allocation4], 0
    %8 = vsyncpa [#allocation7], 0
    %9 = vsyncpa [#allocation5], 0
    // Predicated region
    $region2: #{tpu_custom_call.1} parent=1 // pred_check
      _
    $region3: #{tpu_custom_call.1} parent=1 // pred_check_branch
      %11 = sbr.rel (0) target = $region5
    $region4: #{tpu_custom_call.1} parent=1 // pred_region
      %s12 = sadd.s32 0, 0
      %s13 = smul.u32 2, %s12
      %s15 = ssub.s32 256, 256
      %16 = vsyncadd [#allocation4], %s15
      %s17 = smul.addr %s13, 128
      %s18 = scalar_lea.hbm %s0, %s17
      %s19 = sshll.u32 [#allocation3], 4
      %s20 = int_to_ptr.vmem [resolvable:$true] %s19
      %25 = dma.hbm_to_vmem [thread:$0]  %s18, 256, %s20, [#allocation4], 128, 128, 8
    $region5: #{tpu_custom_call.1} parent=1 // pred_fallthru
      _
    // Predicated region
    $region6: #{tpu_custom_call.1} parent=1 // pred_check
      _
    $region7: #{tpu_custom_call.1} parent=1 // pred_check_branch
      %27 = sbr.rel (0) target = $region9
    $region8: #{tpu_custom_call.1} parent=1 // pred_region
      %s28 = sadd.s32 0, 0
      %s29 = smul.u32 2, %s28
      %s31 = ssub.s32 128, 128
      %32 = vsyncadd [#allocation7], %s31
      %s33 = smul.addr %s29, 64
      %s34 = scalar_lea.hbm %s1, %s33
      %s35 = sshll.u32 [#allocation6], 4
      %s36 = int_to_ptr.vmem [resolvable:$true] %s35
      %41 = dma.hbm_to_vmem [thread:$0]  %s34, 128, %s36, [#allocation7], 64, 64, 4
    $region9: #{tpu_custom_call.1} parent=1 // pred_fallthru
      _
    // Predicated region
    $region10: #{tpu_custom_call.1} parent=1 // pred_check
      _
    $region11: #{tpu_custom_call.1} parent=1 // pred_check_branch
      %43 = sbr.rel (0) target = $region13
    $region12: #{tpu_custom_call.1} parent=1 // pred_region
      %44 = dma.done [#allocation4], 256
    $region13: #{tpu_custom_call.1} parent=1 // pred_fallthru
      _
    // Predicated region
    $region14: #{tpu_custom_call.1} parent=1 // pred_check
      _
    $region15: #{tpu_custom_call.1} parent=1 // pred_check_branch
      %46 = sbr.rel (0) target = $region17
    $region16: #{tpu_custom_call.1} parent=1 // pred_region
      %47 = dma.done [#allocation7], 128
    $region17: #{tpu_custom_call.1} parent=1 // pred_fallthru
      _
    %s48 = sadd.s32 0, 0
    %s49 = smul.u32 2, %s48
    %s50 = sadd.s32 0, 0
    %s51 = smul.u32 2, %s50
    %p52 = scmp.eq.s32.totalorder 0, 0
    // Predicated region
    $region18: #{tpu_custom_call.1} parent=1 // pred_check
      %p53 = pneg %p52
    $region19: #{tpu_custom_call.1} parent=1 // pred_check_branch
      %55 = sbr.rel (%p53) target = $region21
    $region20: #{tpu_custom_call.1} parent=1 // pred_region
      %56 = vst [vmem:[#allocation2] sm:$0xff] 0.0
    $region21: #{tpu_custom_call.1} parent=1 // pred_fallthru
      _
    %v57 = vld [vmem:[#allocation3] sm:$0xff]
    %v58 = vld [vmem:[#allocation3 + $0x8] sm:$0xff]
    %v59 = vld [vmem:[#allocation6] sm:$0xf]
    %v60 = vld [vmem:[#allocation6 + $0x4] sm:$0xf]
    %v61 = vunpack.c.l.bf16 %v59
    %v62 = vunpack.c.l.bf16 %v60
    %v63 = vand.u32 2147483647, %v57
    %v64 = vand.u32 2147483647, %v58
    %v65 = vsub.f32 0.0, %v63
    %v66 = vsub.f32 0.0, %v64
    %v67 = vmul.f32 %v65, 1.442695
    %v68 = vpow.pop %v67
    %v69 = vmul.f32 %v66, 1.442695
    %v70 = vpow.pop %v69
    %v71 = vmax.f32 %v57, 0.0
    %v72 = vmax.f32 %v58, 0.0
    %v73 = vmul.f32 %v57, %v61
    %v74 = vmul.f32 %v58, %v62
    %v75 = vsub.f32 %v71, %v73
    %v76 = vsub.f32 %v72, %v74
    %v77 = vadd.f32 %v68, 1.0
    %v78 = vlog2.pop %v77
    %v79 = vmul.f32 %v78, 0.6931472
    %v80 = vmul.f32 -0.5, %v68
    %v81 = vadd.f32 %v80, 1.0
    %v82 = vmul.f32 %v81, %v68
    %v83 = vand.u32 2147483647, %v68
    %vm84 = vcmp.lt.f32.partialorder %v83, 0.0004427343
    %v85 = vsel %vm84, %v82, %v79
    %v86 = vadd.f32 %v70, 1.0
    %v87 = vlog2.pop %v86
    %v88 = vmul.f32 %v87, 0.6931472
    %v89 = vmul.f32 -0.5, %v70
    %v90 = vadd.f32 %v89, 1.0
    %v91 = vmul.f32 %v90, %v70
    %v92 = vand.u32 2147483647, %v70
    %vm93 = vcmp.lt.f32.partialorder %v92, 0.0004427343
    %v94 = vsel %vm93, %v91, %v88
    %v95 = vadd.f32 %v75, %v85
    %v96 = vadd.f32 %v76, %v94
    %vm97 = vcmp.gt.f32.partialorder %v57, 0.0
    %vm98 = vcmp.gt.f32.partialorder %v58, 0.0
    %vm99 = vcmp.gt.f32.partialorder %v61, 0.5
    %vm100 = vcmp.gt.f32.partialorder %v62, 0.5
    %vm101 = vmxor %vm97, %vm99
    %vm102 = vmxor %vm98, %vm100
    %v103 = vsel %vm101, 1.0, %v68
    %v104 = vsel %vm102, 1.0, %v70
    %v105 = vadd.f32 %v68, 1.0
    %v106 = vadd.f32 %v70, 1.0
    %v107 = vrcp.pop %v105
    %v108 = vrcp.pop %v106
    %v109 = vmul.f32 %v103, %v107
    %v110 = vmul.f32 %v104, %v108
    %v111 = vmul.f32 %v109, %v109
    %v112 = vmul.f32 %v110, %v110
    %v113 = vmul.f32 %v111, %v95
    %v114 = vmul.f32 %v112, %v96
    %v115 = vmul.f32 %v61, -0.5
    %v116 = vmul.f32 %v62, -0.5
    %v117 = vadd.f32 %v115, 0.75
    %v118 = vadd.f32 %v116, 0.75
    %v119 = vmul.f32 %v117, %v113
    %v120 = vmul.f32 %v118, %v114
    %v121 = vld [vmem:[#allocation2] sm:$0xff]
    %v122 = vadd.f32 %v119, %v120
    %v123 = vadd.f32 %v121, %v122
    %124 = vst [vmem:[#allocation2] sm:$0xff] %v123
    // Predicated region
    $region22: #{tpu_custom_call.1} parent=1 // pred_check
      %p125 = pneg %p52
    $region23: #{tpu_custom_call.1} parent=1 // pred_check_branch
      %127 = sbr.rel (%p125) target = $region25
    $region24: #{tpu_custom_call.1} parent=1 // pred_region
      %v128 = vld [vmem:[#allocation2] sm:$0xff]
      %129 = vst [vmem:[#allocation8] sm:$0xff] %v128
    $region25: #{tpu_custom_call.1} parent=1 // pred_fallthru
      _
    // Predicated region
    $region26: #{tpu_custom_call.1} parent=1 // pred_check
      _
    $region27: #{tpu_custom_call.1} parent=1 // pred_check_branch
      %131 = sbr.rel (0) target = $region29
    $region28: #{tpu_custom_call.1} parent=1 // pred_region
      %s133 = ssub.s32 128, 128
      %134 = vsyncadd [#allocation5], %s133
      %s136 = sshll.u32 [#allocation8], 4
      %s137 = int_to_ptr.vmem [resolvable:$true] %s136
      %139 = dma.vmem_to_hbm [thread:$0]  %s137, 128, %s2, [#allocation5]
    $region29: #{tpu_custom_call.1} parent=1 // pred_fallthru
      _
    // Predicated region
    $region30: #{tpu_custom_call.1} parent=1 // pred_check
      _
    $region31: #{tpu_custom_call.1} parent=1 // pred_check_branch
      %141 = sbr.rel (0) target = $region33
    $region32: #{tpu_custom_call.1} parent=1 // pred_region
      %142 = dma.done [#allocation5], 128
    $region33: #{tpu_custom_call.1} parent=1 // pred_fallthru
      _
    %143 = vsyncpa [#allocation4], 1
    %144 = vsyncpa [#allocation7], 1
    %145 = vsyncpa [#allocation5], 1

</llo_original>
